<compile_context>
chip_gen: v7x
topology: tpu7x:2x2x1
jax: 0.10.0
libtpu: 0.0.40
codegen_flags: <defaults>
</compile_context>

<pallas_src>
import functools
import math

import jax
import jax.numpy as jnp
from jax import lax
from jax.experimental import pallas as pl
from jax.experimental.pallas import tpu as pltpu


# ----------------------------------------------------------------------------
# Hardware / tiling helpers
# ----------------------------------------------------------------------------
def _round_up(x, m):
    return -(-x // m) * m


def _on_tpu():
    try:
        return jax.devices()[0].platform == "tpu"
    except Exception:
        return False


def _vmem_budget_bytes():
    # 75% of physical VMEM (v5e/v6e: 128 MiB, v7x: 64 MiB per TC), leaving
    # headroom for compiler scratch.  Falls back to the v7x-safe number.
    try:
        cap = int(pltpu.get_tpu_info().vmem_capacity_bytes)
    except Exception:
        cap = 64 * 1024 * 1024
    return (cap * 3) // 4


def _num_tensorcores():
    try:
        info = pltpu.get_tpu_info()
        for attr in ("num_cores", "num_tensorcores", "tensorcore_count", "core_count"):
            v = getattr(info, attr, None)
            if isinstance(v, int) and v > 0:
                return v
    except Exception:
        pass
    return 1


def _lane_pack_params(h):
    """Fold g rows into the lane axis so the last block dim is a multiple of 128."""
    if h >= 128 or h % 128 == 0:
        return 1, h
    g = 128 // math.gcd(h, 128)
    w = g * h
    if w <= 512:                 # keep the segment matrix / MXU work small
        return g, w
    return 1, h                  # fallthrough: masked stores, still correct


def _choose_row_tile(r, w, itemsize, n_arrays, vmem_budget, num_cores):
    # Largest row tile whose double-buffered IO blocks plus ~8 live f32
    # temporaries per element fit the VMEM budget.
    denom = w * (2 * n_arrays * itemsize + 8 * 4)
    tr = vmem_budget // max(denom, 1)
    tr = max(8, (tr // 8) * 8)
    tr = min(tr, 1024)           # bound per-step latency / v7x VMEM pressure
    if num_cores > 1 and r > 8 * num_cores:
        # Give each TensorCore >= ~2 blocks on multi-TC chips (v7x).
        tr = min(tr, max(8, _round_up(-(-r // (2 * num_cores)), 8)))
    if tr >= r:
        tr = r                   # single full-extent block (always legal)
    return tr


def _segment_matrix(w, n):
    # Block-diagonal 0/1 matrix seg[i, j] = (i//n == j//n); exact in bf16.
    idx = jnp.arange(w, dtype=jnp.int32) // jnp.int32(n)
    return (idx[:, None] == idx[None, :]).astype(jnp.bfloat16)


# ----------------------------------------------------------------------------
# LayerNorm kernels (torch-module semantics: unbiased std, eps added to std)
# ----------------------------------------------------------------------------
def _ln_rows_kernel(alpha_ref, bias_ref, x_ref, o_ref, *, eps, n):
    # x_ref: (TR, H); plain per-row reduce over the last axis.
    x = x_ref[...].astype(jnp.float32)
    mean = jnp.mean(x, axis=-1, keepdims=True)
    diff = x - mean
    # torch .std() is unbiased; n == 1 is NaN in torch, guard the divide here.
    var = jnp.sum(diff * diff, axis=-1, keepdims=True) * jnp.float32(1.0 / max(n - 1, 1))
    d = jnp.sqrt(var) + jnp.float32(eps)
    r = pl.reciprocal(d, approx=True)          # EUP slot (otherwise idle)
    r = r * (jnp.float32(2.0) - d * r)         # one Newton step
    o_ref[...] = (diff * (alpha_ref[0, 0] * r) + bias_ref[0, 0]).astype(o_ref.dtype)


def _ln_packed_kernel(alpha_ref, bias_ref, seg_ref, x_ref, o_ref, *, eps, n):
    # x_ref: (TR, W) with W = g*n (multiple of 128); each lane-row holds g
    # logical rows of length n.  Segmented reduce+broadcast runs on the idle
    # MXU against the precomputed block-diagonal matrix seg_ref (resident in
    # VMEM via a constant index_map -> no per-step rebuild).
    x = x_ref[...].astype(jnp.float32)
    seg = seg_ref[...]

    def seg_sum(v):
        # bf16 hi/lo split keeps ~16 mantissa bits (~2^-16 relative error).
        hi = v.astype(jnp.bfloat16)
        lo = (v - hi.astype(jnp.float32)).astype(jnp.bfloat16)
        return (jnp.dot(hi, seg, preferred_element_type=jnp.float32)
                + jnp.dot(lo, seg, preferred_element_type=jnp.float32))

    mean = seg_sum(x) * jnp.float32(1.0 / n)
    diff = x - mean
    var = seg_sum(diff * diff) * jnp.float32(1.0 / max(n - 1, 1))
    d = jnp.sqrt(var) + jnp.float32(eps)
    r = pl.reciprocal(d, approx=True)
    r = r * (jnp.float32(2.0) - d * r)
    o_ref[...] = (diff * (alpha_ref[0, 0] * r) + bias_ref[0, 0]).astype(o_ref.dtype)


def layernorm(x, alpha, bias, eps=1e-6):
    """LayerNorm over the last axis, matching the custom PyTorch LayerNorm."""
    orig_shape = x.shape
    h = int(orig_shape[-1])
    x2 = x.reshape(-1, h)
    rows = x2.shape[0]

    g, w = _lane_pack_params(h)
    r = -(-rows // g)
    pad_rows = r * g - rows                    # < g rows; only pad if needed
    if pad_rows:
        x2 = jnp.pad(x2, ((0, pad_rows), (0, 0)))
    xp = x2.reshape(r, w)                      # free (layout-preserving)

    budget = _vmem_budget_bytes()
    cores = _num_tensorcores()
    tr = _choose_row_tile(r, w, x.dtype.itemsize, 2, budget, cores)
    grid = -(-r // tr)                         # ragged last block is masked

    alpha2 = jnp.asarray(alpha, jnp.float32).reshape(1, 1)
    bias2 = jnp.asarray(bias, jnp.float32).reshape(1, 1)

    smem_spec = pl.BlockSpec((1, 1), lambda i: (0, 0),
                             memory_space=pltpu.MemorySpace.SMEM)
    blk = pl.BlockSpec((tr, w), lambda i: (i, 0))
    cp = pltpu.CompilerParams(dimension_semantics=("parallel",),
                              vmem_limit_bytes=budget)

    if g > 1:
        seg = _segment_matrix(w, h)
        out = pl.pallas_call(
            functools.partial(_ln_packed_kernel, eps=float(eps), n=h),
            out_shape=jax.ShapeDtypeStruct((r, w), x.dtype),
            grid_spec=pltpu.PrefetchScalarGridSpec(
                num_scalar_prefetch=0, grid=(grid,),
                in_specs=[smem_spec, smem_spec,
                          pl.BlockSpec((w, w), lambda i: (0, 0)), blk],
                out_specs=blk),
            compiler_params=cp,
        )(alpha2, bias2, seg, xp)
    else:
        out = pl.pallas_call(
            functools.partial(_ln_rows_kernel, eps=float(eps), n=h),
            out_shape=jax.ShapeDtypeStruct((r, w), x.dtype),
            grid_spec=pltpu.PrefetchScalarGridSpec(
                num_scalar_prefetch=0, grid=(grid,),
                in_specs=[smem_spec, smem_spec, blk],
                out_specs=blk),
            compiler_params=cp,
        )(alpha2, bias2, xp)

    out = out.reshape(r * g, h)
    if pad_rows:
        out = out[:rows]
    return out.reshape(orig_shape)


# ----------------------------------------------------------------------------
# Fused residual add (+ optional dropout)
# ----------------------------------------------------------------------------
def _add_kernel(x_ref, y_ref, o_ref):
    o_ref[...] = (x_ref[...].astype(jnp.float32)
                  + y_ref[...].astype(jnp.float32)).astype(o_ref.dtype)


def _add_dropout_tpu_kernel(seed_ref, x_ref, y_ref, o_ref, *, thresh, inv_keep):
    # In-kernel hardware PRNG (TPU only); exact integer-threshold keep mask.
    pltpu.prng_seed(seed_ref[0, 0] + pl.program_id(0))
    bits = pltpu.prng_random_bits(y_ref.shape)
    if bits.dtype != jnp.int32:
        bits = pltpu.bitcast(bits, jnp.int32)
    y = y_ref[...].astype(jnp.float32) * jnp.float32(inv_keep)
    kept = jnp.where(bits < jnp.int32(thresh), y, jnp.float32(0.0))
    o_ref[...] = (x_ref[...].astype(jnp.float32) + kept).astype(o_ref.dtype)


def _add_dropout_bits_kernel(x_ref, y_ref, bits_ref, o_ref, *, thresh, inv_keep):
    # Portable path: random int32 bits streamed in as a 4th HBM input.
    y = y_ref[...].astype(jnp.float32) * jnp.float32(inv_keep)
    kept = jnp.where(bits_ref[...] < jnp.int32(thresh), y, jnp.float32(0.0))
    o_ref[...] = (x_ref[...].astype(jnp.float32) + kept).astype(o_ref.dtype)


def residual_add(x, y, *, dropout_p=0.0, training=False, seed=0):
    assert x.shape == y.shape
    orig_shape = x.shape
    h = int(orig_shape[-1])
    x2 = x.reshape(-1, h)
    y2 = y.reshape(-1, h)
    rows = x2.shape[0]

    g, w = _lane_pack_params(h)
    r = -(-rows // g)
    pad_rows = r * g - rows
    if pad_rows:
        x2 = jnp.pad(x2, ((0, pad_rows), (0, 0)))
        y2 = jnp.pad(y2, ((0, pad_rows), (0, 0)))
    xp = x2.reshape(r, w)
    yp = y2.reshape(r, w)

    budget = _vmem_budget_bytes()
    cores = _num_tensorcores()
    do_dropout = training and float(dropout_p) > 0.0
    use_tpu_prng = do_dropout and _on_tpu()
    n_arrays = 3 if (not do_dropout or use_tpu_prng) else 4
    tr = _choose_row_tile(r, w, x.dtype.itemsize, n_arrays, budget, cores)
    grid = -(-r // tr)

    blk = pl.BlockSpec((tr, w), lambda i: (i, 0))
    cp = pltpu.CompilerParams(dimension_semantics=("parallel",),
                              vmem_limit_bytes=budget)
    # TODO(synk): optional input_output_aliases (alias output onto x) is safe
    # only when the caller's x is dead after the call, so it is not enabled.

    if do_dropout:
        keep_prob = 1.0 - float(dropout_p)
        inv_keep = 1.0 / keep_prob
        thresh = int(round(keep_prob * (2.0 ** 32))) - 2 ** 31
        thresh = max(-(2 ** 31), min(thresh, 2 ** 31 - 1))
        if use_tpu_prng:
            seed_arr = jnp.full((1, 1), int(seed), dtype=jnp.int32)
            smem_spec = pl.BlockSpec((1, 1), lambda i: (0, 0),
                                     memory_space=pltpu.MemorySpace.SMEM)
            out = pl.pallas_call(
                functools.partial(_add_dropout_tpu_kernel,
                                  thresh=thresh, inv_keep=inv_keep),
                out_shape=jax.ShapeDtypeStruct((r, w), x.dtype),
                grid_spec=pltpu.PrefetchScalarGridSpec(
                    num_scalar_prefetch=0, grid=(grid,),
                    in_specs=[smem_spec, blk, blk],
                    out_specs=blk),
                compiler_params=cp,
            )(seed_arr, xp, yp)
        else:
            bits_u = jax.random.bits(jax.random.PRNGKey(int(seed)), (r, w),
                                     dtype=jnp.uint32)
            bits = lax.bitcast_convert_type(bits_u, jnp.int32)
            out = pl.pallas_call(
                functools.partial(_add_dropout_bits_kernel,
                                  thresh=thresh, inv_keep=inv_keep),
                out_shape=jax.ShapeDtypeStruct((r, w), x.dtype),
                grid_spec=pltpu.PrefetchScalarGridSpec(
                    num_scalar_prefetch=0, grid=(grid,),
                    in_specs=[blk, blk, blk],
                    out_specs=blk),
                compiler_params=cp,
            )(xp, yp, bits)
    else:  # eval mode or p == 0: dropout is identity
        out = pl.pallas_call(
            _add_kernel,
            out_shape=jax.ShapeDtypeStruct((r, w), x.dtype),
            grid_spec=pltpu.PrefetchScalarGridSpec(
                num_scalar_prefetch=0, grid=(grid,),
                in_specs=[blk, blk],
                out_specs=blk),
            compiler_params=cp,
        )(xp, yp)

    out = out.reshape(r * g, h)
    if pad_rows:
        out = out[:rows]
    return out.reshape(orig_shape)


def residual_connection(x, sublayer, alpha, bias, *, eps=1e-6,
                        dropout_p=0.0, training=False, seed=0):
    """ResidualConnection.forward: x + dropout(sublayer(LayerNorm(x)))."""
    # TODO(synk): `sublayer` is an arbitrary callable passed at forward time;
    # it runs as plain JAX between the two Pallas kernels.
    y = sublayer(layernorm(x, alpha, bias, eps))
    return residual_add(x, y, dropout_p=dropout_p, training=training, seed=seed)


# ----------------------------------------------------------------------------
# Self-test
# ----------------------------------------------------------------------------
if __name__ == "__main__":
    key = jax.random.PRNGKey(0)
    kx, kw, kx2 = jax.random.split(key, 3)

    eps = 1e-6
    alpha = jnp.ones((1,), jnp.float32)   # nn.Parameter(torch.ones(1))
    bias = jnp.zeros((1,), jnp.float32)   # nn.Parameter(torch.zeros(1))

    def ref_layernorm(t):
        mean = jnp.mean(t, axis=-1, keepdims=True)
        std = jnp.sqrt(jnp.sum((t - mean) ** 2, axis=-1, keepdims=True)
                       / (t.shape[-1] - 1))      # unbiased, like torch .std()
        return alpha[0] * (t - mean) / (std + eps) + bias[0]

    # --- Test 1: hidden < 128 (lane-packed LN path), eval mode --------------
    batch, seq, hidden = 2, 8, 32
    x = jax.random.normal(kx, (batch, seq, hidden), dtype=jnp.float32)
    w_sub = jax.random.normal(kw, (hidden, hidden), dtype=jnp.float32) * 0.1
    sublayer = lambda t: jnp.tanh(jnp.dot(t, w_sub))

    out = residual_connection(x, sublayer, alpha, bias, eps=eps,
                              dropout_p=0.1, training=False)
    jax.block_until_ready(out)
    ref = x + sublayer(ref_layernorm(x))
    assert jnp.allclose(out, ref, atol=1e-4, rtol=1e-4), "eval mismatch (h=32)"

    # --- Test 2: hidden >= 128 (plain row LN path), eval mode ---------------
    x_wide = jax.random.normal(kx2, (batch, seq, 128), dtype=jnp.float32)
    sub2 = lambda t: 0.5 * t
    out2 = residual_connection(x_wide, sub2, alpha, bias, eps=eps,
                               dropout_p=0.0, training=False)
    jax.block_until_ready(out2)
    ref2 = x_wide + sub2(ref_layernorm(x_wide))
    assert jnp.allclose(out2, ref2, atol=1e-4, rtol=1e-4), "eval mismatch (h=128)"

    # --- Test 3: training mode, dropout (structural check) ------------------
    p = 0.5
    out3 = residual_connection(x, sublayer, alpha, bias, eps=eps,
                               dropout_p=p, training=True, seed=123)
    jax.block_until_ready(out3)
    y_ref = sublayer(ref_layernorm(x))
    d = out3 - x
    scaled = y_ref / (1.0 - p)
    is_dropped = jnp.abs(d) <= 1e-3
    is_kept = jnp.abs(d - scaled) <= 1e-3 * (1.0 + jnp.abs(scaled))
    assert bool(jnp.all(is_dropped | is_kept)), "dropout structure mismatch"
    frac_dropped = float(jnp.mean(is_dropped.astype(jnp.float32)))
    assert 0.2 < frac_dropped < 0.8, "dropout rate implausible"

    print("KERNEL_OK")
</pallas_src>

<mosaic_0001>
module attributes {stable_mosaic.version = 11 : i64} {
  func.func @_ln_packed_kernel(%arg0: i32, %arg1: memref<1x1xf32, #tpu.memory_space<smem>>, %arg2: memref<1x1xf32, #tpu.memory_space<smem>>, %arg3: memref<128x128xbf16, #tpu.memory_space<vmem>>, %arg4: memref<4x128xf32, #tpu.memory_space<vmem>>, %arg5: memref<4x128xf32, #tpu.memory_space<vmem>>) attributes {dimension_semantics = [#tpu.dimension_semantics<parallel>], iteration_bounds = array<i64: 1>, scalar_prefetch = 0 : i64, scratch_operands = 0 : i64, tpu.core_type = #tpu.core_type<tc>, window_params = [{transform_indices = @transform_0, window_bounds = array<i64: 1, 1>}, {transform_indices = @transform_1, window_bounds = array<i64: 1, 1>}, {pipeline_mode = #tpu.pipeline_mode<synchronous>, transform_indices = @transform_2, window_bounds = array<i64: 128, 128>}, {transform_indices = @transform_3, window_bounds = array<i64: 4, 128>}, {transform_indices = @transform_4, window_bounds = array<i64: 4, 128>}]} {
    %c0 = arith.constant 0 : index
    %c0_0 = arith.constant 0 : index
    %0 = vector.load %arg4[%c0, %c0_0] : memref<4x128xf32, #tpu.memory_space<vmem>>, vector<4x128xf32>
    %c0_1 = arith.constant 0 : index
    %c0_2 = arith.constant 0 : index
    %1 = vector.load %arg3[%c0_1, %c0_2] : memref<128x128xbf16, #tpu.memory_space<vmem>>, vector<128x128xbf16>
    %2 = arith.truncf %0 : vector<4x128xf32> to vector<4x128xbf16>
    %3 = arith.extf %2 : vector<4x128xbf16> to vector<4x128xf32>
    %4 = arith.subf %0, %3 : vector<4x128xf32>
    %5 = arith.truncf %4 : vector<4x128xf32> to vector<4x128xbf16>
    %cst = arith.constant dense<0.000000e+00> : vector<4x128xf32>
    %6 = tpu.matmul %2, %1, %cst {dimension_numbers = #tpu.dot_dimension_numbers<[1], [0], [0], [1], [0, 0, 1, 1], [], []>} : vector<4x128xbf16>, vector<128x128xbf16>, vector<4x128xf32> -> vector<4x128xf32>
    %cst_3 = arith.constant dense<0.000000e+00> : vector<4x128xf32>
    %7 = tpu.matmul %5, %1, %cst_3 {dimension_numbers = #tpu.dot_dimension_numbers<[1], [0], [0], [1], [0, 0, 1, 1], [], []>} : vector<4x128xbf16>, vector<128x128xbf16>, vector<4x128xf32> -> vector<4x128xf32>
    %8 = arith.addf %6, %7 : vector<4x128xf32>
    %cst_4 = arith.constant 3.125000e-02 : f32
    %9 = vector.broadcast %cst_4 : f32 to vector<4x128xf32>
    %10 = arith.mulf %8, %9 : vector<4x128xf32>
    %11 = arith.subf %0, %10 : vector<4x128xf32>
    %12 = arith.mulf %11, %11 : vector<4x128xf32>
    %13 = arith.truncf %12 : vector<4x128xf32> to vector<4x128xbf16>
    %14 = arith.extf %13 : vector<4x128xbf16> to vector<4x128xf32>
    %15 = arith.subf %12, %14 : vector<4x128xf32>
    %16 = arith.truncf %15 : vector<4x128xf32> to vector<4x128xbf16>
    %cst_5 = arith.constant dense<0.000000e+00> : vector<4x128xf32>
    %17 = tpu.matmul %13, %1, %cst_5 {dimension_numbers = #tpu.dot_dimension_numbers<[1], [0], [0], [1], [0, 0, 1, 1], [], []>} : vector<4x128xbf16>, vector<128x128xbf16>, vector<4x128xf32> -> vector<4x128xf32>
    %cst_6 = arith.constant dense<0.000000e+00> : vector<4x128xf32>
    %18 = tpu.matmul %16, %1, %cst_6 {dimension_numbers = #tpu.dot_dimension_numbers<[1], [0], [0], [1], [0, 0, 1, 1], [], []>} : vector<4x128xbf16>, vector<128x128xbf16>, vector<4x128xf32> -> vector<4x128xf32>
    %19 = arith.addf %17, %18 : vector<4x128xf32>
    %cst_7 = arith.constant 0.0322580636 : f32
    %20 = vector.broadcast %cst_7 : f32 to vector<4x128xf32>
    %21 = arith.mulf %19, %20 : vector<4x128xf32>
    %22 = math.sqrt %21 : vector<4x128xf32>
    %cst_8 = arith.constant 9.99999997E-7 : f32
    %23 = vector.broadcast %cst_8 : f32 to vector<4x128xf32>
    %24 = arith.addf %22, %23 : vector<4x128xf32>
    %25 = tpu.reciprocal %24 {approx = true} : vector<4x128xf32> -> vector<4x128xf32>
    %26 = arith.mulf %24, %25 : vector<4x128xf32>
    %cst_9 = arith.constant 2.000000e+00 : f32
    %27 = vector.broadcast %cst_9 : f32 to vector<4x128xf32>
    %28 = arith.subf %27, %26 : vector<4x128xf32>
    %29 = arith.mulf %25, %28 : vector<4x128xf32>
    %c0_10 = arith.constant 0 : index
    %c0_11 = arith.constant 0 : index
    %30 = memref.load %arg1[%c0_10, %c0_11] : memref<1x1xf32, #tpu.memory_space<smem>>
    %31 = vector.broadcast %30 : f32 to vector<4x128xf32>
    %32 = arith.mulf %31, %29 : vector<4x128xf32>
    %33 = arith.mulf %11, %32 : vector<4x128xf32>
    %c0_12 = arith.constant 0 : index
    %c0_13 = arith.constant 0 : index
    %34 = memref.load %arg2[%c0_12, %c0_13] : memref<1x1xf32, #tpu.memory_space<smem>>
    %35 = vector.broadcast %34 : f32 to vector<4x128xf32>
    %36 = arith.addf %33, %35 : vector<4x128xf32>
    %c0_14 = arith.constant 0 : index
    %c0_15 = arith.constant 0 : index
    %37 = vector.load %arg5[%c0_14, %c0_15] : memref<4x128xf32, #tpu.memory_space<vmem>>, vector<4x128xf32>
    tpu.vector_store %arg5[%c0_14, %c0_15], %36 {strides = array<i32>} : memref<4x128xf32, #tpu.memory_space<vmem>>, vector<4x128xf32>,
    return
  }
  func.func @transform_0(%arg0: i32) -> (i32, i32) {
    %c0_i32 = arith.constant 0 : i32
    %c0_i32_0 = arith.constant 0 : i32
    %c0_i32_1 = arith.constant 0 : i32
    return %c0_i32, %c0_i32_0 : i32, i32
  }
  func.func @transform_1(%arg0: i32) -> (i32, i32) {
    %c0_i32 = arith.constant 0 : i32
    %c0_i32_0 = arith.constant 0 : i32
    %c0_i32_1 = arith.constant 0 : i32
    return %c0_i32, %c0_i32_0 : i32, i32
  }
  func.func @transform_2(%arg0: i32) -> (i32, i32) {
    %c0_i32 = arith.constant 0 : i32
    %c0_i32_0 = arith.constant 0 : i32
    %c0_i32_1 = arith.constant 0 : i32
    return %c0_i32, %c0_i32_0 : i32, i32
  }
  func.func @transform_3(%arg0: i32) -> (i32, i32) {
    %c0_i32 = arith.constant 0 : i32
    %c0_i32_0 = arith.constant 0 : i32
    return %arg0, %c0_i32 : i32, i32
  }
  func.func @transform_4(%arg0: i32) -> (i32, i32) {
    %c0_i32 = arith.constant 0 : i32
    %c0_i32_0 = arith.constant 0 : i32
    return %arg0, %c0_i32 : i32, i32
  }
}

</mosaic_0001>

<llo_original>
// kernel: tpu_custom_call.1
$region0: #{tpu_custom_call.1}
  #allocation0 [shape = 'u32[]', space=smem, size = 0x4, offset = 0x4, fixed_abs, tag = 'smem constant byte address 0x4 - core index']
  #allocation1 [shape = 'u32[144,128]{1,0:T(1,128)}', space=vmem, size = 0x12000, scoped, tag = 'internal scratch']
  #allocation2 [shape = 'f32[1,1]{1,0:T(1,128)S(6)}', space=smem, size = 0x200, scoped, tag = 'scoped memory for tpu_custom_call.1']
  #allocation3 [shape = 'f32[1,1]{1,0:T(1,128)S(6)}', space=smem, size = 0x200, scoped, tag = 'scoped memory for tpu_custom_call.1']
  %s0 = inlined_call_operand.<no memory space> [shape: f32[1,1], index: 0, kind: input, shape index: {}]
  %s1 = inlined_call_operand.<no memory space> [shape: f32[1,1], index: 1, kind: input, shape index: {}]
  %s2 = inlined_call_operand.hbm [shape: bf16[128,128], index: 2, kind: input, shape index: {}]
  %s3 = inlined_call_operand.vmem [shape: f32[4,128], index: 3, kind: input, shape index: {}]
  %s4 = inlined_call_operand.hbm [shape: f32[4,128], index: 4, kind: output, shape index: {}]
  %s5 = sld [smem:[#allocation0]]
  $region30: #{tpu_custom_call.1} parent=0
    _
  %s7 = ssub.s32 1, %s5
  %s8 = scalar_select 0, %s7, %s5
  %9 = sst [smem:[#allocation2]] %s0
  %10 = sst [smem:[#allocation3]] %s1
  $region1: #{tpu_custom_call.1} parent=0
    #allocation4 [shape = 'u8[32768]{0}', space=vmem, size = 0x8000, scoped, tag = 'input window, operand 2, single buffered']
    #allocation5 [shape = 's32[1]{0}', space=sflag, size = 0x4, scoped, tag = 'scoped memory for tpu_custom_call.1']
    #allocation6 [shape = 's32[1]{0}', space=sflag, size = 0x4, scoped, tag = 'scoped memory for tpu_custom_call.1']
    #allocation7 [shape = 'u8[2048]{0}', space=vmem, size = 0x800, scoped, tag = 'output window, operand 0, single buffered']
    %11 = vsyncpa [#allocation5], 0
    %12 = vsyncpa [#allocation6], 0
    // Predicated region
    $region2: #{tpu_custom_call.1} parent=1 // pred_check
      _
    $region3: #{tpu_custom_call.1} parent=1 // pred_check_branch
      %14 = sbr.rel (0) target = $region5
    $region4: #{tpu_custom_call.1} parent=1 // pred_region
      _
    $region5: #{tpu_custom_call.1} parent=1 // pred_fallthru
      _
    // Predicated region
    $region6: #{tpu_custom_call.1} parent=1 // pred_check
      _
    $region7: #{tpu_custom_call.1} parent=1 // pred_check_branch
      %16 = sbr.rel (0) target = $region9
    $region8: #{tpu_custom_call.1} parent=1 // pred_region
      _
    $region9: #{tpu_custom_call.1} parent=1 // pred_fallthru
      _
    // Predicated region
    $region10: #{tpu_custom_call.1} parent=1 // pred_check
      _
    $region11: #{tpu_custom_call.1} parent=1 // pred_check_branch
      %18 = sbr.rel (0) target = $region13
    $region12: #{tpu_custom_call.1} parent=1 // pred_region
      %s20 = ssub.s32 1024, 1024
      %21 = vsyncadd [#allocation5], %s20
      %s22 = sshll.u32 [#allocation4], 4
      %s23 = int_to_ptr.vmem [resolvable:$true] %s22
      %28 = dma.hbm_to_vmem [thread:$0]  %s2, 1024, %s23, [#allocation5], 64, 64, 4
    $region13: #{tpu_custom_call.1} parent=1 // pred_fallthru
      _
    // Predicated region
    $region14: #{tpu_custom_call.1} parent=1 // pred_check
      _
    $region15: #{tpu_custom_call.1} parent=1 // pred_check_branch
      %30 = sbr.rel (0) target = $region17
    $region16: #{tpu_custom_call.1} parent=1 // pred_region
      _
    $region17: #{tpu_custom_call.1} parent=1 // pred_fallthru
      _
    // Predicated region
    $region18: #{tpu_custom_call.1} parent=1 // pred_check
      _
    $region19: #{tpu_custom_call.1} parent=1 // pred_check_branch
      %32 = sbr.rel (0) target = $region21
    $region20: #{tpu_custom_call.1} parent=1 // pred_region
      %33 = dma.done [#allocation5], 1024
    $region21: #{tpu_custom_call.1} parent=1 // pred_fallthru
      _
    %v35 = vld [vmem:[%s3] sm:$0xf]
    %v36 = vld [vmem:[#allocation4] sm:$0xf]
    %v37 = vld [vmem:[#allocation4 + $0x4] sm:$0xf]
    %v38 = vld [vmem:[#allocation4 + $0x8] sm:$0xf]
    %v39 = vld [vmem:[#allocation4 + $0xc] sm:$0xf]
    %v40 = vld [vmem:[#allocation4 + $0x10] sm:$0xf]
    %v41 = vld [vmem:[#allocation4 + $0x14] sm:$0xf]
    %v42 = vld [vmem:[#allocation4 + $0x18] sm:$0xf]
    %v43 = vld [vmem:[#allocation4 + $0x1c] sm:$0xf]
    %v44 = vld [vmem:[#allocation4 + $0x20] sm:$0xf]
    %v45 = vld [vmem:[#allocation4 + $0x24] sm:$0xf]
    %v46 = vld [vmem:[#allocation4 + $0x28] sm:$0xf]
    %v47 = vld [vmem:[#allocation4 + $0x2c] sm:$0xf]
    %v48 = vld [vmem:[#allocation4 + $0x30] sm:$0xf]
    %v49 = vld [vmem:[#allocation4 + $0x34] sm:$0xf]
    %v50 = vld [vmem:[#allocation4 + $0x38] sm:$0xf]
    %v51 = vld [vmem:[#allocation4 + $0x3c] sm:$0xf]
    %v52 = vpack.c.bf16 %v35, %v35
    %v53 = vunpack.c.l.bf16 %v52
    %v54 = vsub.f32 %v35, %v53
    %v55 = vpack.c.bf16 %v54, %v54
    %v72 = vunpack.c.l.b16 %v36
    %v73 = vunpack.c.l.b16 %v37
    %v74 = vunpack.c.l.b16 %v38
    %v75 = vunpack.c.l.b16 %v39
    %v76 = vunpack.c.l.b16 %v40
    %v77 = vunpack.c.l.b16 %v41
    %v78 = vunpack.c.l.b16 %v42
    %v79 = vunpack.c.l.b16 %v43
    %v80 = vunpack.c.l.b16 %v44
    %v81 = vunpack.c.l.b16 %v45
    %v82 = vunpack.c.l.b16 %v46
    %v83 = vunpack.c.l.b16 %v47
    %v84 = vunpack.c.l.b16 %v48
    %v85 = vunpack.c.l.b16 %v49
    %v86 = vunpack.c.l.b16 %v50
    %v87 = vunpack.c.l.b16 %v51
    %v88 = vpack.c.b16 %v73, %v72
    %v89 = vpack.c.b16 %v75, %v74
    %v90 = vpack.c.b16 %v77, %v76
    %v91 = vpack.c.b16 %v79, %v78
    %v92 = vpack.c.b16 %v81, %v80
    %v93 = vpack.c.b16 %v83, %v82
    %v94 = vpack.c.b16 %v85, %v84
    %v95 = vpack.c.b16 %v87, %v86
    %104 = vmatprep.subr.bf16.mxu0 0
    %105 = vmatpush1.bf16.msra.mxu0 %v88
    %106 = vmatprep.subr.bf16.mxu0 0
    %107 = vmatpush1.bf16.msra.mxu0 %v89
    %108 = vmatprep.subr.bf16.mxu0 0
    %109 = vmatpush1.bf16.msra.mxu0 %v90
    %110 = vmatprep.subr.bf16.mxu0 0
    %111 = vmatpush1.bf16.msra.mxu0 %v91
    %112 = vmatprep.subr.bf16.mxu0 0
    %113 = vmatpush1.bf16.msra.mxu0 %v92
    %114 = vmatprep.subr.bf16.mxu0 0
    %115 = vmatpush1.bf16.msra.mxu0 %v93
    %116 = vmatprep.subr.bf16.mxu0 0
    %117 = vmatpush1.bf16.msra.mxu0 %v94
    %118 = vmatprep.subr.bf16.mxu0 0
    %119 = vmatpush1.bf16.msra.mxu0 %v95
    %120 = vmatprep.subr.bf16.mxu0 0
    %121 = vmatpush1.bf16.msra.mxu0 0
    %122 = vmatprep.subr.bf16.mxu0 0
    %123 = vmatpush1.bf16.msra.mxu0 0
    %124 = vmatprep.subr.bf16.mxu0 0
    %125 = vmatpush1.bf16.msra.mxu0 0
    %126 = vmatprep.subr.bf16.mxu0 0
    %127 = vmatpush1.bf16.msra.mxu0 0
    %128 = vmatprep.subr.bf16.mxu0 0
    %129 = vmatpush1.bf16.msra.mxu0 0
    %130 = vmatprep.subr.bf16.mxu0 0
    %131 = vmatpush1.bf16.msra.mxu0 0
    %132 = vmatprep.subr.bf16.mxu0 0
    %133 = vmatpush1.bf16.msra.mxu0 0
    %134 = vmatprep.subr.bf16.mxu0 0
    %135 = vmatpush1.bf16.msra.mxu0 0
    %136 = vmatprep.mubr.bf16.mxu0 0
    %137 = vmatmul.mubr.bf16.gmra.mrb[0].mxu0 %v55
    %v138 = vpop.f32.mrb[0].mxu0
    %v139 = vadd.f32 0.0, %v138
    %v140 = vpop.f32.mrb[0].mxu0
    %v141 = vpop.f32.mrb[0].mxu0
    %v142 = vpop.f32.mrb[0].mxu0
    %143 = vdwg.mxu0
    %144 = vmatprep.subr.bf16.mxu0 0
    %145 = vmatpush1.bf16.msra.mxu0 %v88
    %146 = vmatprep.subr.bf16.mxu0 0
    %147 = vmatpush1.bf16.msra.mxu0 %v89
    %148 = vmatprep.subr.bf16.mxu0 0
    %149 = vmatpush1.bf16.msra.mxu0 %v90
    %150 = vmatprep.subr.bf16.mxu0 0
    %151 = vmatpush1.bf16.msra.mxu0 %v91
    %152 = vmatprep.subr.bf16.mxu0 0
    %153 = vmatpush1.bf16.msra.mxu0 %v92
    %154 = vmatprep.subr.bf16.mxu0 0
    %155 = vmatpush1.bf16.msra.mxu0 %v93
    %156 = vmatprep.subr.bf16.mxu0 0
    %157 = vmatpush1.bf16.msra.mxu0 %v94
    %158 = vmatprep.subr.bf16.mxu0 0
    %159 = vmatpush1.bf16.msra.mxu0 %v95
    %160 = vmatprep.subr.bf16.mxu0 0
    %161 = vmatpush1.bf16.msra.mxu0 0
    %162 = vmatprep.subr.bf16.mxu0 0
    %163 = vmatpush1.bf16.msra.mxu0 0
    %164 = vmatprep.subr.bf16.mxu0 0
    %165 = vmatpush1.bf16.msra.mxu0 0
    %166 = vmatprep.subr.bf16.mxu0 0
    %167 = vmatpush1.bf16.msra.mxu0 0
    %168 = vmatprep.subr.bf16.mxu0 0
    %169 = vmatpush1.bf16.msra.mxu0 0
    %170 = vmatprep.subr.bf16.mxu0 0
    %171 = vmatpush1.bf16.msra.mxu0 0
    %172 = vmatprep.subr.bf16.mxu0 0
    %173 = vmatpush1.bf16.msra.mxu0 0
    %174 = vmatprep.subr.bf16.mxu0 0
    %175 = vmatpush1.bf16.msra.mxu0 0
    %176 = vmatprep.mubr.bf16.mxu0 0
    %177 = vmatmul.mubr.bf16.gmra.mrb[0].mxu0 %v52
    %v178 = vpop.f32.mrb[0].mxu0
    %v179 = vadd.f32 %v139, %v178
    %v180 = vpop.f32.mrb[0].mxu0
    %v181 = vpop.f32.mrb[0].mxu0
    %v182 = vpop.f32.mrb[0].mxu0
    %183 = vdwg.mxu0
    %v184 = vmul.f32 %v179, 0.03125
    %v185 = vsub.f32 %v35, %v184
    %v186 = vmul.f32 %v185, %v185
    %v187 = vpack.c.bf16 %v186, %v186
    %v188 = vunpack.c.l.bf16 %v187
    %v189 = vsub.f32 %v186, %v188
    %v190 = vpack.c.bf16 %v189, %v189
    %191 = vmatprep.subr.bf16.mxu0 0
    %192 = vmatpush1.bf16.msra.mxu0 %v88
    %193 = vmatprep.subr.bf16.mxu0 0
    %194 = vmatpush1.bf16.msra.mxu0 %v89
    %195 = vmatprep.subr.bf16.mxu0 0
    %196 = vmatpush1.bf16.msra.mxu0 %v90
    %197 = vmatprep.subr.bf16.mxu0 0
    %198 = vmatpush1.bf16.msra.mxu0 %v91
    %199 = vmatprep.subr.bf16.mxu0 0
    %200 = vmatpush1.bf16.msra.mxu0 %v92
    %201 = vmatprep.subr.bf16.mxu0 0
    %202 = vmatpush1.bf16.msra.mxu0 %v93
    %203 = vmatprep.subr.bf16.mxu0 0
    %204 = vmatpush1.bf16.msra.mxu0 %v94
    %205 = vmatprep.subr.bf16.mxu0 0
    %206 = vmatpush1.bf16.msra.mxu0 %v95
    %207 = vmatprep.subr.bf16.mxu0 0
    %208 = vmatpush1.bf16.msra.mxu0 0
    %209 = vmatprep.subr.bf16.mxu0 0
    %210 = vmatpush1.bf16.msra.mxu0 0
    %211 = vmatprep.subr.bf16.mxu0 0
    %212 = vmatpush1.bf16.msra.mxu0 0
    %213 = vmatprep.subr.bf16.mxu0 0
    %214 = vmatpush1.bf16.msra.mxu0 0
    %215 = vmatprep.subr.bf16.mxu0 0
    %216 = vmatpush1.bf16.msra.mxu0 0
    %217 = vmatprep.subr.bf16.mxu0 0
    %218 = vmatpush1.bf16.msra.mxu0 0
    %219 = vmatprep.subr.bf16.mxu0 0
    %220 = vmatpush1.bf16.msra.mxu0 0
    %221 = vmatprep.subr.bf16.mxu0 0
    %222 = vmatpush1.bf16.msra.mxu0 0
    %223 = vmatprep.mubr.bf16.mxu0 0
    %224 = vmatmul.mubr.bf16.gmra.mrb[0].mxu0 %v190
    %v225 = vpop.f32.mrb[0].mxu0
    %v226 = vadd.f32 0.0, %v225
    %v227 = vpop.f32.mrb[0].mxu0
    %v228 = vpop.f32.mrb[0].mxu0
    %v229 = vpop.f32.mrb[0].mxu0
    %230 = vdwg.mxu0
    %231 = vmatprep.subr.bf16.mxu0 0
    %232 = vmatpush1.bf16.msra.mxu0 %v88
    %233 = vmatprep.subr.bf16.mxu0 0
    %234 = vmatpush1.bf16.msra.mxu0 %v89
    %235 = vmatprep.subr.bf16.mxu0 0
    %236 = vmatpush1.bf16.msra.mxu0 %v90
    %237 = vmatprep.subr.bf16.mxu0 0
    %238 = vmatpush1.bf16.msra.mxu0 %v91
    %239 = vmatprep.subr.bf16.mxu0 0
    %240 = vmatpush1.bf16.msra.mxu0 %v92
    %241 = vmatprep.subr.bf16.mxu0 0
    %242 = vmatpush1.bf16.msra.mxu0 %v93
    %243 = vmatprep.subr.bf16.mxu0 0
    %244 = vmatpush1.bf16.msra.mxu0 %v94
    %245 = vmatprep.subr.bf16.mxu0 0
    %246 = vmatpush1.bf16.msra.mxu0 %v95
    %247 = vmatprep.subr.bf16.mxu0 0
    %248 = vmatpush1.bf16.msra.mxu0 0
    %249 = vmatprep.subr.bf16.mxu0 0
    %250 = vmatpush1.bf16.msra.mxu0 0
    %251 = vmatprep.subr.bf16.mxu0 0
    %252 = vmatpush1.bf16.msra.mxu0 0
    %253 = vmatprep.subr.bf16.mxu0 0
    %254 = vmatpush1.bf16.msra.mxu0 0
    %255 = vmatprep.subr.bf16.mxu0 0
    %256 = vmatpush1.bf16.msra.mxu0 0
    %257 = vmatprep.subr.bf16.mxu0 0
    %258 = vmatpush1.bf16.msra.mxu0 0
    %259 = vmatprep.subr.bf16.mxu0 0
    %260 = vmatpush1.bf16.msra.mxu0 0
    %261 = vmatprep.subr.bf16.mxu0 0
    %262 = vmatpush1.bf16.msra.mxu0 0
    %263 = vmatprep.mubr.bf16.mxu0 0
    %264 = vmatmul.mubr.bf16.gmra.mrb[0].mxu0 %v187
    %v265 = vpop.f32.mrb[0].mxu0
    %v266 = vadd.f32 %v226, %v265
    %v267 = vpop.f32.mrb[0].mxu0
    %v268 = vpop.f32.mrb[0].mxu0
    %v269 = vpop.f32.mrb[0].mxu0
    %270 = vdwg.mxu0
    %v271 = vmul.f32 %v266, 0.032258064
    %v272 = vrsqrt.pop %v271
    %v273 = vmul.f32 %v271, %v272
    %vm274 = vcmp.eq.f32.partialorder %v271, inf
    %v275 = vsel %vm274, %v271, %v273
    %vm276 = vcmp.eq.f32.partialorder %v271, 0.0
    %v277 = vand.u32 %v271, 2147483648
    %v278 = vsel %vm276, %v277, %v275
    %v279 = vadd.f32 %v278, 1e-06
    %v280 = vrcp.pop %v279
    %v281 = vmul.f32 %v279, %v280
    %v282 = vsub.f32 2.0, %v281
    %v283 = vmul.f32 %v280, %v282
    %s284 = sld [smem:[#allocation2]]
    %v285 = vstv %s284
    %v286 = vmul.f32 %v285, %v283
    %v287 = vmul.f32 %v185, %v286
    %s288 = sld [smem:[#allocation3]]
    %v289 = vstv %s288
    %v290 = vadd.f32 %v287, %v289
    %291 = vst [vmem:[#allocation7] sm:$0xf] %v290
    // Predicated region
    $region22: #{tpu_custom_call.1} parent=1 // pred_check
      _
    $region23: #{tpu_custom_call.1} parent=1 // pred_check_branch
      %293 = sbr.rel (0) target = $region25
    $region24: #{tpu_custom_call.1} parent=1 // pred_region
      %s295 = ssub.s32 64, 64
      %296 = vsyncadd [#allocation6], %s295
      %s298 = sshll.u32 [#allocation7], 4
      %s299 = int_to_ptr.vmem [resolvable:$true] %s298
      %301 = dma.vmem_to_hbm [thread:$0]  %s299, 64, %s4, [#allocation6]
    $region25: #{tpu_custom_call.1} parent=1 // pred_fallthru
      _
    // Predicated region
    $region26: #{tpu_custom_call.1} parent=1 // pred_check
      _
    $region27: #{tpu_custom_call.1} parent=1 // pred_check_branch
      %303 = sbr.rel (0) target = $region29
    $region28: #{tpu_custom_call.1} parent=1 // pred_region
      %304 = dma.done [#allocation6], 64
    $region29: #{tpu_custom_call.1} parent=1 // pred_fallthru
      _
    %305 = vsyncpa [#allocation5], 1
    %306 = vsyncpa [#allocation6], 1

</llo_original>
